<compile_context>
chip_gen: v6e
topology: v6e:2x2x1
jax: 0.10.0
libtpu: 0.0.40
codegen_flags: <defaults>
</compile_context>

<pallas_src>
import functools

import numpy as np
import jax
import jax.numpy as jnp
from jax.experimental import pallas as pl
from jax.experimental.pallas import tpu as pltpu


@functools.lru_cache(maxsize=None)
def _bilinear_1d_matrix(in_size: int, scale_factor: int) -> np.ndarray:
    """PyTorch nn.Upsample(mode='bilinear', align_corners=False) 1-D weights.

    Returns M of shape (out_size, in_size) with out = M @ in along that axis.
    All entries are multiples of 1/(2*scale_factor) -> exact in bfloat16.
    """
    out_size = in_size * scale_factor
    i = np.arange(out_size, dtype=np.float64)
    src = (i + 0.5) / scale_factor - 0.5
    src = np.maximum(src, 0.0)                       # PyTorch clamps negative src to 0
    i0 = np.minimum(np.floor(src).astype(np.int64), in_size - 1)
    i1 = np.minimum(i0 + 1, in_size - 1)
    w1 = (src - i0).astype(np.float32)
    w0 = (1.0 - w1).astype(np.float32)
    M = np.zeros((out_size, in_size), dtype=np.float32)
    M[np.arange(out_size), i0] += w0
    M[np.arange(out_size), i1] += w1
    return M


def _conv_lif_kernel(x_ref, w_ref, o_ref, *, num_steps, beta, threshold, mem_clip):
    # x_ref: (1, C, TL)  f32   spatial-lane tile of x laid out as (N, C, H*W)
    # w_ref: (K, C)      bf16  1x1 conv weight
    # o_ref: (1, K, TL)  bf16  spike-rate mean, already in (N, K, H*W) layout
    x = x_ref[0].astype(jnp.bfloat16)                      # in-VMEM cast: native bf16 MXU
    cur = jnp.dot(w_ref[...], x, preferred_element_type=jnp.float32)   # (K, TL) f32
    cur_rst = cur - threshold                              # loop-invariant reset branch

    # Step 0: mem_prev = 0 -> reset = 0 -> mem = cur (reset term skipped).
    mem = cur
    spk = mem > threshold                                  # Heaviside fire
    acc = spk.astype(jnp.float32)
    steps_left = num_steps - 1

    if steps_left <= 8:                                    # small static unroll (VPU)
        for _ in range(steps_left):
            memc = jnp.clip(mem, -mem_clip, mem_clip)      # torch.clamp(mem, -5, 5)
            # reset_{t+1} == spk_t because threshold <= mem_clip (clamp never flips it);
            # reset*threshold folded into one select.
            mem = beta * memc + jnp.where(spk, cur_rst, cur)
            spk = mem > threshold
            acc = acc + spk.astype(jnp.float32)
    else:
        # Bounded live ranges for long step counts (review item); float-only carry.
        def body(_, carry):
            mem, acc = carry
            memc = jnp.clip(mem, -mem_clip, mem_clip)
            mem = beta * memc + jnp.where(mem > threshold, cur_rst, cur)
            acc = acc + (mem > threshold).astype(jnp.float32)
            return mem, acc
        mem, acc = jax.lax.fori_loop(0, steps_left, body, (mem, acc))

    # torch.clamp(spk, -1, 1) is a no-op for {0, 1} spikes; final mem clamp is dead code.
    o_ref[0] = (acc * (1.0 / num_steps)).astype(o_ref.dtype)


def _upsample_kernel(s_ref, a_ref, bt_ref, o_ref, *, K):
    # s_ref:  (1, K, H, W)   spike-rate plane for one batch   bf16
    # a_ref:  (Ho, H)        height interpolation matrix      bf16
    # bt_ref: (W, Wo)        width interpolation matrix^T     bf16
    # o_ref:  (1, K, Ho, Wo)                                  f32
    a = a_ref[...]
    bt = bt_ref[...]
    for k in range(K):                                     # static unroll; K = num_classes
        t = jnp.dot(a, s_ref[0, k], preferred_element_type=jnp.float32)      # (Ho, W)
        o_ref[0, k] = jnp.dot(t.astype(jnp.bfloat16), bt,
                              preferred_element_type=jnp.float32)            # (Ho, Wo)


def snn_head_forward(x, conv_w, *, num_steps=1, beta=0.9, scale_factor=4,
                     threshold=1.0, mem_clip=5.0, lane_tile=4096):
    """x: (N, C, H, W) f32, conv_w: (K, C, 1, 1) -> (N, K, H*sf, W*sf) f32."""
    N, C, H, W = x.shape
    K = conv_w.shape[0]
    Ho, Wo = H * scale_factor, W * scale_factor
    HW = H * W
    # reset_{t+1} == spk_t reuse in the LIF loop requires the clamp not to flip the
    # threshold comparison.
    assert -mem_clip <= threshold <= mem_clip

    # ---------------- Kernel A: 1x1 conv + multi-step LIF ----------------
    # x stays in its natural layout; (N, C, H, W) -> (N, C, H*W) is a free reshape.
    x3 = x.reshape(N, C, HW)
    w2 = conv_w.reshape(K, C).astype(jnp.bfloat16)

    tl = min(lane_tile, HW)
    if tl < HW:
        tl = max(128, (tl // 128) * 128)                   # lane-aligned tiles when tiling
    S = pl.cdiv(HW, tl)
    # Per-block VMEM (double-buffered): ~2*4*C*tl + 2*2*K*tl + ~4*4*K*tl of LIF temps.
    # Default tl=4096 stays well under v7x's 32 MiB scoped default for C <= 256.
    # TODO(synk): for very large C, add a C-reduction grid axis with a VMEM accumulator
    # instead of shrinking the lane tile.

    kern_a = functools.partial(_conv_lif_kernel, num_steps=num_steps, beta=beta,
                               threshold=threshold, mem_clip=mem_clip)
    spk_mean = pl.pallas_call(
        kern_a,
        out_shape=jax.ShapeDtypeStruct((N, K, HW), jnp.bfloat16),
        grid=(N, S),
        in_specs=[pl.BlockSpec((1, C, tl), lambda n, s: (n, 0, s)),
                  pl.BlockSpec((K, C), lambda n, s: (0, 0))],
        out_specs=pl.BlockSpec((1, K, tl), lambda n, s: (n, 0, s)),
        compiler_params=pltpu.CompilerParams(
            dimension_semantics=("parallel", "parallel")),
        cost_estimate=pl.CostEstimate(
            flops=2 * K * C * N * HW + 8 * num_steps * K * N * HW,
            transcendentals=0,
            bytes_accessed=4 * N * C * HW + 2 * K * C + 2 * N * K * HW),
    )(x3, w2)

    # Glue is a zero-cost contiguous reshape (no transpose, no slice).
    s = spk_mean.reshape(N, K, H, W)

    # ---------------- Kernel B: separable bilinear upsample, one block per batch -------
    a_mat = jnp.asarray(_bilinear_1d_matrix(H, scale_factor), jnp.bfloat16)      # (Ho, H)
    bt_mat = jnp.asarray(_bilinear_1d_matrix(W, scale_factor).T, jnp.bfloat16)   # (W, Wo)

    kern_b = functools.partial(_upsample_kernel, K=K)
    out = pl.pallas_call(
        kern_b,
        out_shape=jax.ShapeDtypeStruct((N, K, Ho, Wo), jnp.float32),
        grid=(N,),
        in_specs=[pl.BlockSpec((1, K, H, W), lambda n: (n, 0, 0, 0)),
                  pl.BlockSpec((Ho, H), lambda n: (0, 0)),
                  pl.BlockSpec((W, Wo), lambda n: (0, 0))],
        out_specs=pl.BlockSpec((1, K, Ho, Wo), lambda n: (n, 0, 0, 0)),
        compiler_params=pltpu.CompilerParams(dimension_semantics=("parallel",)),
        cost_estimate=pl.CostEstimate(
            flops=N * K * (2 * Ho * H * W + 2 * Ho * W * Wo),
            transcendentals=0,
            bytes_accessed=2 * N * K * H * W + 2 * (Ho * H + W * Wo)
                           + 4 * N * K * Ho * Wo),
    )(s, a_mat, bt_mat)
    return out


def snn_head_reference(x, conv_w, *, num_steps, beta, scale_factor,
                       threshold=1.0, mem_clip=5.0):
    """Pure-JAX reference of the literal snnTorch forward math."""
    K, C = conv_w.shape[0], conv_w.shape[1]
    cur = jnp.einsum('kc,nchw->nkhw', conv_w.reshape(K, C), x,
                     precision=jax.lax.Precision.HIGHEST)
    mem = jnp.zeros_like(cur)
    acc = jnp.zeros_like(cur)
    for _ in range(num_steps):
        reset = (mem > threshold).astype(cur.dtype)
        mem = beta * mem + cur - reset * threshold
        spk = (mem > threshold).astype(cur.dtype)
        mem = jnp.clip(mem, -mem_clip, mem_clip)
        spk = jnp.clip(spk, -1.0, 1.0)
        acc = acc + spk
    s = acc / num_steps
    H, W = x.shape[2], x.shape[3]
    A = jnp.asarray(_bilinear_1d_matrix(H, scale_factor))
    B = jnp.asarray(_bilinear_1d_matrix(W, scale_factor))
    return jnp.einsum('oh,nkhw,pw->nkop', A, s, B,
                      precision=jax.lax.Precision.HIGHEST)


if __name__ == "__main__":
    # Shapes consistent with the module: N=2, C_prev=8, num_classes=4, 16x16 spatial,
    # scale_factor=4, num_steps=2  ->  output (2, 4, 64, 64).
    N, C_prev, num_classes, H, W = 2, 8, 4, 16, 16
    num_steps, beta, scale_factor = 2, 0.9, 4

    key = jax.random.PRNGKey(0)
    kx, kw = jax.random.split(key)
    # Quantize inputs/weights to small dyadic fractions so the conv result (and hence the
    # LIF threshold comparison and the bf16 intermediates) is bit-identical to the
    # HIGHEST-precision f32 reference.
    x = jnp.round(32.0 * jax.random.normal(kx, (N, C_prev, H, W), dtype=jnp.float32)) / 32.0
    conv_w = jnp.round(
        16.0 * 0.5 * jax.random.normal(kw, (num_classes, C_prev, 1, 1), dtype=jnp.float32)
    ) / 16.0

    fwd = jax.jit(functools.partial(snn_head_forward, num_steps=num_steps, beta=beta,
                                    scale_factor=scale_factor))
    out = jax.block_until_ready(fwd(x, conv_w))
    assert out.shape == (N, num_classes, H * scale_factor, W * scale_factor)

    ref = snn_head_reference(x, conv_w, num_steps=num_steps, beta=beta,
                             scale_factor=scale_factor)
    np.testing.assert_allclose(np.asarray(out), np.asarray(ref), rtol=1e-4, atol=1e-4)

    print("KERNEL_OK")
</pallas_src>

<mosaic_0001>
module attributes {stable_mosaic.version = 11 : i64} {
  func.func @_conv_lif_kernel(%arg0: i32, %arg1: i32, %arg2: memref<1x8x256xf32, #tpu.memory_space<vmem>>, %arg3: memref<4x8xbf16, #tpu.memory_space<vmem>>, %arg4: memref<1x4x256xbf16, #tpu.memory_space<vmem>>) attributes {dimension_semantics = [#tpu.dimension_semantics<parallel>, #tpu.dimension_semantics<parallel>], iteration_bounds = array<i64: 2, 1>, scalar_prefetch = 0 : i64, scratch_operands = 0 : i64, tpu.core_type = #tpu.core_type<tc>, window_params = [{transform_indices = @transform_0, window_bounds = array<i64: 1, 8, 256>}, {pipeline_mode = #tpu.pipeline_mode<synchronous>, transform_indices = @transform_1, window_bounds = array<i64: 4, 8>}, {transform_indices = @transform_2, window_bounds = array<i64: 1, 4, 256>}]} {
    %c0 = arith.constant 0 : index
    %c0_0 = arith.constant 0 : index
    %c0_1 = arith.constant 0 : index
    %0 = vector.load %arg2[%c0, %c0_0, %c0_1] : memref<1x8x256xf32, #tpu.memory_space<vmem>>, vector<1x8x256xf32>
    %1 = vector.shape_cast %0 : vector<1x8x256xf32> to vector<8x256xf32>
    %2 = arith.truncf %1 : vector<8x256xf32> to vector<8x256xbf16>
    %c0_2 = arith.constant 0 : index
    %c0_3 = arith.constant 0 : index
    %3 = vector.load %arg3[%c0_2, %c0_3] : memref<4x8xbf16, #tpu.memory_space<vmem>>, vector<4x8xbf16>
    %cst = arith.constant dense<0.000000e+00> : vector<4x256xf32>
    %4 = tpu.matmul %3, %2, %cst {dimension_numbers = #tpu.dot_dimension_numbers<[1], [0], [0], [1], [0, 0, 1, 1], [], []>} : vector<4x8xbf16>, vector<8x256xbf16>, vector<4x256xf32> -> vector<4x256xf32>
    %cst_4 = arith.constant 1.000000e+00 : f32
    %5 = vector.broadcast %cst_4 : f32 to vector<4x256xf32>
    %6 = arith.subf %4, %5 : vector<4x256xf32>
    %cst_5 = arith.constant 1.000000e+00 : f32
    %7 = vector.broadcast %cst_5 : f32 to vector<4x256xf32>
    %8 = arith.cmpf ogt, %4, %7 : vector<4x256xf32>
    %9 = arith.extui %8 : vector<4x256xi1> to vector<4x256xi32>
    %10 = arith.sitofp %9 : vector<4x256xi32> to vector<4x256xf32>
    %cst_6 = arith.constant -5.000000e+00 : f32
    %cst_7 = arith.constant 5.000000e+00 : f32
    %11 = vector.broadcast %cst_6 : f32 to vector<4x256xf32>
    %12 = arith.maximumf %11, %4 : vector<4x256xf32>
    %13 = vector.broadcast %cst_7 : f32 to vector<4x256xf32>
    %14 = arith.minimumf %13, %12 : vector<4x256xf32>
    %cst_8 = arith.constant 0.899999976 : f32
    %15 = vector.broadcast %cst_8 : f32 to vector<4x256xf32>
    %16 = arith.mulf %15, %14 : vector<4x256xf32>
    %17 = arith.select %8, %6, %4 : vector<4x256xi1>, vector<4x256xf32>
    %18 = arith.addf %16, %17 : vector<4x256xf32>
    %cst_9 = arith.constant 1.000000e+00 : f32
    %19 = vector.broadcast %cst_9 : f32 to vector<4x256xf32>
    %20 = arith.cmpf ogt, %18, %19 : vector<4x256xf32>
    %21 = arith.extui %20 : vector<4x256xi1> to vector<4x256xi32>
    %22 = arith.sitofp %21 : vector<4x256xi32> to vector<4x256xf32>
    %23 = arith.addf %10, %22 : vector<4x256xf32>
    %cst_10 = arith.constant 5.000000e-01 : f32
    %24 = vector.broadcast %cst_10 : f32 to vector<4x256xf32>
    %25 = arith.mulf %23, %24 : vector<4x256xf32>
    %26 = arith.truncf %25 : vector<4x256xf32> to vector<4x256xbf16>
    %c0_11 = arith.constant 0 : index
    %c0_12 = arith.constant 0 : index
    %c0_13 = arith.constant 0 : index
    %27 = vector.load %arg4[%c0_11, %c0_12, %c0_13] : memref<1x4x256xbf16, #tpu.memory_space<vmem>>, vector<1x4x256xbf16>
    %28 = vector.shape_cast %27 : vector<1x4x256xbf16> to vector<4x256xbf16>
    %29 = vector.shape_cast %26 : vector<4x256xbf16> to vector<1x4x256xbf16>
    tpu.vector_store %arg4[%c0_11, %c0_12, %c0_13], %29 {strides = array<i32>} : memref<1x4x256xbf16, #tpu.memory_space<vmem>>, vector<1x4x256xbf16>,
    return
  }
  func.func @transform_0(%arg0: i32, %arg1: i32) -> (i32, i32, i32) {
    %c0_i32 = arith.constant 0 : i32
    %c0_i32_0 = arith.constant 0 : i32
    return %arg0, %c0_i32, %arg1 : i32, i32, i32
  }
  func.func @transform_1(%arg0: i32, %arg1: i32) -> (i32, i32) {
    %c0_i32 = arith.constant 0 : i32
    %c0_i32_0 = arith.constant 0 : i32
    %c0_i32_1 = arith.constant 0 : i32
    return %c0_i32, %c0_i32_0 : i32, i32
  }
  func.func @transform_2(%arg0: i32, %arg1: i32) -> (i32, i32, i32) {
    %c0_i32 = arith.constant 0 : i32
    %c0_i32_0 = arith.constant 0 : i32
    return %arg0, %c0_i32, %arg1 : i32, i32, i32
  }
}

module attributes {stable_mosaic.version = 11 : i64} {
  func.func @_upsample_kernel(%arg0: i32, %arg1: memref<1x4x16x16xbf16, #tpu.memory_space<vmem>>, %arg2: memref<64x16xbf16, #tpu.memory_space<vmem>>, %arg3: memref<16x64xbf16, #tpu.memory_space<vmem>>, %arg4: memref<1x4x64x64xf32, #tpu.memory_space<vmem>>) attributes {dimension_semantics = [#tpu.dimension_semantics<parallel>], iteration_bounds = array<i64: 2>, scalar_prefetch = 0 : i64, scratch_operands = 0 : i64, tpu.core_type = #tpu.core_type<tc>, window_params = [{transform_indices = @transform_0, window_bounds = array<i64: 1, 4, 16, 16>}, {pipeline_mode = #tpu.pipeline_mode<synchronous>, transform_indices = @transform_1, window_bounds = array<i64: 64, 16>}, {pipeline_mode = #tpu.pipeline_mode<synchronous>, transform_indices = @transform_2, window_bounds = array<i64: 16, 64>}, {transform_indices = @transform_3, window_bounds = array<i64: 1, 4, 64, 64>}]} {
    %c0 = arith.constant 0 : index
    %c0_0 = arith.constant 0 : index
    %0 = vector.load %arg2[%c0, %c0_0] : memref<64x16xbf16, #tpu.memory_space<vmem>>, vector<64x16xbf16>
    %c0_1 = arith.constant 0 : index
    %c0_2 = arith.constant 0 : index
    %1 = vector.load %arg3[%c0_1, %c0_2] : memref<16x64xbf16, #tpu.memory_space<vmem>>, vector<16x64xbf16>
    %c0_3 = arith.constant 0 : index
    %c0_4 = arith.constant 0 : index
    %c0_5 = arith.constant 0 : index
    %c0_6 = arith.constant 0 : index
    %2 = vector.load %arg1[%c0_3, %c0_4, %c0_5, %c0_6] : memref<1x4x16x16xbf16, #tpu.memory_space<vmem>>, vector<1x1x16x16xbf16>
    %3 = vector.shape_cast %2 : vector<1x1x16x16xbf16> to vector<16x16xbf16>
    %cst = arith.constant dense<0.000000e+00> : vector<64x16xf32>
    %4 = tpu.matmul %0, %3, %cst {dimension_numbers = #tpu.dot_dimension_numbers<[1], [0], [0], [1], [0, 0, 1, 1], [], []>} : vector<64x16xbf16>, vector<16x16xbf16>, vector<64x16xf32> -> vector<64x16xf32>
    %5 = arith.truncf %4 : vector<64x16xf32> to vector<64x16xbf16>
    %cst_7 = arith.constant dense<0.000000e+00> : vector<64x64xf32>
    %6 = tpu.matmul %5, %1, %cst_7 {dimension_numbers = #tpu.dot_dimension_numbers<[1], [0], [0], [1], [0, 0, 1, 1], [], []>} : vector<64x16xbf16>, vector<16x64xbf16>, vector<64x64xf32> -> vector<64x64xf32>
    %c0_8 = arith.constant 0 : index
    %c0_9 = arith.constant 0 : index
    %c0_10 = arith.constant 0 : index
    %c0_11 = arith.constant 0 : index
    %7 = vector.load %arg4[%c0_8, %c0_9, %c0_10, %c0_11] : memref<1x4x64x64xf32, #tpu.memory_space<vmem>>, vector<1x1x64x64xf32>
    %8 = vector.shape_cast %7 : vector<1x1x64x64xf32> to vector<64x64xf32>
    %9 = vector.shape_cast %6 : vector<64x64xf32> to vector<1x1x64x64xf32>
    tpu.vector_store %arg4[%c0_8, %c0_9, %c0_10, %c0_11], %9 {strides = array<i32>} : memref<1x4x64x64xf32, #tpu.memory_space<vmem>>, vector<1x1x64x64xf32>,
    %c0_12 = arith.constant 0 : index
    %c1 = arith.constant 1 : index
    %c0_13 = arith.constant 0 : index
    %c0_14 = arith.constant 0 : index
    %10 = vector.load %arg1[%c0_12, %c1, %c0_13, %c0_14] : memref<1x4x16x16xbf16, #tpu.memory_space<vmem>>, vector<1x1x16x16xbf16>
    %11 = vector.shape_cast %10 : vector<1x1x16x16xbf16> to vector<16x16xbf16>
    %cst_15 = arith.constant dense<0.000000e+00> : vector<64x16xf32>
    %12 = tpu.matmul %0, %11, %cst_15 {dimension_numbers = #tpu.dot_dimension_numbers<[1], [0], [0], [1], [0, 0, 1, 1], [], []>} : vector<64x16xbf16>, vector<16x16xbf16>, vector<64x16xf32> -> vector<64x16xf32>
    %13 = arith.truncf %12 : vector<64x16xf32> to vector<64x16xbf16>
    %cst_16 = arith.constant dense<0.000000e+00> : vector<64x64xf32>
    %14 = tpu.matmul %13, %1, %cst_16 {dimension_numbers = #tpu.dot_dimension_numbers<[1], [0], [0], [1], [0, 0, 1, 1], [], []>} : vector<64x16xbf16>, vector<16x64xbf16>, vector<64x64xf32> -> vector<64x64xf32>
    %c0_17 = arith.constant 0 : index
    %c1_18 = arith.constant 1 : index
    %c0_19 = arith.constant 0 : index
    %c0_20 = arith.constant 0 : index
    %15 = vector.load %arg4[%c0_17, %c1_18, %c0_19, %c0_20] : memref<1x4x64x64xf32, #tpu.memory_space<vmem>>, vector<1x1x64x64xf32>
    %16 = vector.shape_cast %15 : vector<1x1x64x64xf32> to vector<64x64xf32>
    %17 = vector.shape_cast %14 : vector<64x64xf32> to vector<1x1x64x64xf32>
    tpu.vector_store %arg4[%c0_17, %c1_18, %c0_19, %c0_20], %17 {strides = array<i32>} : memref<1x4x64x64xf32, #tpu.memory_space<vmem>>, vector<1x1x64x64xf32>,
    %c0_21 = arith.constant 0 : index
    %c2 = arith.constant 2 : index
    %c0_22 = arith.constant 0 : index
    %c0_23 = arith.constant 0 : index
    %18 = vector.load %arg1[%c0_21, %c2, %c0_22, %c0_23] : memref<1x4x16x16xbf16, #tpu.memory_space<vmem>>, vector<1x1x16x16xbf16>
    %19 = vector.shape_cast %18 : vector<1x1x16x16xbf16> to vector<16x16xbf16>
    %cst_24 = arith.constant dense<0.000000e+00> : vector<64x16xf32>
    %20 = tpu.matmul %0, %19, %cst_24 {dimension_numbers = #tpu.dot_dimension_numbers<[1], [0], [0], [1], [0, 0, 1, 1], [], []>} : vector<64x16xbf16>, vector<16x16xbf16>, vector<64x16xf32> -> vector<64x16xf32>
    %21 = arith.truncf %20 : vector<64x16xf32> to vector<64x16xbf16>
    %cst_25 = arith.constant dense<0.000000e+00> : vector<64x64xf32>
    %22 = tpu.matmul %21, %1, %cst_25 {dimension_numbers = #tpu.dot_dimension_numbers<[1], [0], [0], [1], [0, 0, 1, 1], [], []>} : vector<64x16xbf16>, vector<16x64xbf16>, vector<64x64xf32> -> vector<64x64xf32>
    %c0_26 = arith.constant 0 : index
    %c2_27 = arith.constant 2 : index
    %c0_28 = arith.constant 0 : index
    %c0_29 = arith.constant 0 : index
    %23 = vector.load %arg4[%c0_26, %c2_27, %c0_28, %c0_29] : memref<1x4x64x64xf32, #tpu.memory_space<vmem>>, vector<1x1x64x64xf32>
    %24 = vector.shape_cast %23 : vector<1x1x64x64xf32> to vector<64x64xf32>
    %25 = vector.shape_cast %22 : vector<64x64xf32> to vector<1x1x64x64xf32>
    tpu.vector_store %arg4[%c0_26, %c2_27, %c0_28, %c0_29], %25 {strides = array<i32>} : memref<1x4x64x64xf32, #tpu.memory_space<vmem>>, vector<1x1x64x64xf32>,
    %c0_30 = arith.constant 0 : index
    %c3 = arith.constant 3 : index
    %c0_31 = arith.constant 0 : index
    %c0_32 = arith.constant 0 : index
    %26 = vector.load %arg1[%c0_30, %c3, %c0_31, %c0_32] : memref<1x4x16x16xbf16, #tpu.memory_space<vmem>>, vector<1x1x16x16xbf16>
    %27 = vector.shape_cast %26 : vector<1x1x16x16xbf16> to vector<16x16xbf16>
    %cst_33 = arith.constant dense<0.000000e+00> : vector<64x16xf32>
    %28 = tpu.matmul %0, %27, %cst_33 {dimension_numbers = #tpu.dot_dimension_numbers<[1], [0], [0], [1], [0, 0, 1, 1], [], []>} : vector<64x16xbf16>, vector<16x16xbf16>, vector<64x16xf32> -> vector<64x16xf32>
    %29 = arith.truncf %28 : vector<64x16xf32> to vector<64x16xbf16>
    %cst_34 = arith.constant dense<0.000000e+00> : vector<64x64xf32>
    %30 = tpu.matmul %29, %1, %cst_34 {dimension_numbers = #tpu.dot_dimension_numbers<[1], [0], [0], [1], [0, 0, 1, 1], [], []>} : vector<64x16xbf16>, vector<16x64xbf16>, vector<64x64xf32> -> vector<64x64xf32>
    %c0_35 = arith.constant 0 : index
    %c3_36 = arith.constant 3 : index
    %c0_37 = arith.constant 0 : index
    %c0_38 = arith.constant 0 : index
    %31 = vector.load %arg4[%c0_35, %c3_36, %c0_37, %c0_38] : memref<1x4x64x64xf32, #tpu.memory_space<vmem>>, vector<1x1x64x64xf32>
    %32 = vector.shape_cast %31 : vector<1x1x64x64xf32> to vector<64x64xf32>
    %33 = vector.shape_cast %30 : vector<64x64xf32> to vector<1x1x64x64xf32>
    tpu.vector_store %arg4[%c0_35, %c3_36, %c0_37, %c0_38], %33 {strides = array<i32>} : memref<1x4x64x64xf32, #tpu.memory_space<vmem>>, vector<1x1x64x64xf32>,
    return
  }
  func.func @transform_0(%arg0: i32) -> (i32, i32, i32, i32) {
    %c0_i32 = arith.constant 0 : i32
    %c0_i32_0 = arith.constant 0 : i32
    %c0_i32_1 = arith.constant 0 : i32
    %c0_i32_2 = arith.constant 0 : i32
    return %arg0, %c0_i32, %c0_i32_0, %c0_i32_1 : i32, i32, i32, i32
  }
  func.func @transform_1(%arg0: i32) -> (i32, i32) {
    %c0_i32 = arith.constant 0 : i32
    %c0_i32_0 = arith.constant 0 : i32
    %c0_i32_1 = arith.constant 0 : i32
    return %c0_i32, %c0_i32_0 : i32, i32
  }
  func.func @transform_2(%arg0: i32) -> (i32, i32) {
    %c0_i32 = arith.constant 0 : i32
    %c0_i32_0 = arith.constant 0 : i32
    %c0_i32_1 = arith.constant 0 : i32
    return %c0_i32, %c0_i32_0 : i32, i32
  }
  func.func @transform_3(%arg0: i32) -> (i32, i32, i32, i32) {
    %c0_i32 = arith.constant 0 : i32
    %c0_i32_0 = arith.constant 0 : i32
    %c0_i32_1 = arith.constant 0 : i32
    %c0_i32_2 = arith.constant 0 : i32
    return %arg0, %c0_i32, %c0_i32_0, %c0_i32_1 : i32, i32, i32, i32
  }
}

</mosaic_0001>

<llo_original>
// kernel: snn_head_forward.2
$region0: #{snn_head_forward.2}
  #allocation0 [shape = 'u32[]', space=smem, size = 0x4, offset = 0x4, fixed_abs, tag = 'smem constant byte address 0x4 - core index']
  #allocation1 [shape = 'u32[144,128]{1,0:T(1,128)}', space=vmem, size = 0x12000, scoped, tag = 'internal scratch']
  %s0 = inlined_call_operand.vmem [shape: f32[2,8,256], index: 0, kind: input, shape index: {}]
  %s1 = inlined_call_operand.vmem [shape: bf16[4,8], index: 1, kind: input, shape index: {}]
  %s2 = inlined_call_operand.vmem [shape: bf16[2,4,256], index: 2, kind: output, shape index: {}]
  %s3 = sld [smem:[#allocation0]]
  $region41: #{snn_head_forward.2} parent=0
    _
  %s5 = ssub.s32 1, %s3
  %s6 = scalar_select 0, %s5, %s3
  loop: start=0, step=1, limit=4
  $region2: #{snn_head_forward.2} parent=0 // loop_pre_header
    _
  $region3: #{snn_head_forward.2} parent=0 // loop_header
    %s8 = sphi 0, %s12
    %p9 = scmp.ge.s32.totalorder %s8, 4
    %s15 = sphi 0, %s27
    %s16 = sphi 0, %s23
    %s17 = sphi 0, %s15
    %s18 = sphi 0, %s16
    %s19 = sphi 0, %s17
    %s20 = sphi 0, %s18
    %s32 = sphi 0, %s34
    %s35 = sphi 0, %s32
    %s36 = sphi 0, %s35
    %s52 = sphi 0, %s36
    %s56 = sphi 0, %s56
    %s58 = sphi 0, %s56
    %s59 = sphi 0, %s58
    %s73 = sphi 0, %s59
    %s81 = sphi 0, %s83
    %s84 = sphi 0, %s81
    %s85 = sphi 0, %s84
    %s101 = sphi 0, %s85
  $region4: #{snn_head_forward.2} parent=0 // loop_header_branch
    %11 = sbr.rel (%p9) target = $region8
  $region5: #{snn_head_forward.2} parent=0 // loop_body
    %s13 = ssub.s32 %s8, 1
    %s14 = ssub.s32 %s8, 2
    %s21 = sadd.s32 1, %s16
    %p22 = scmp.ge.s32.totalorder %s21, 1
    %s23 = scalar_select %p22, 0, %s21
    %s24 = sadd.s32 1, %s15
    %s25 = scalar_select %p22, %s24, %s15
    %p26 = scmp.ge.s32.totalorder %s25, 2
    %s27 = scalar_select %p26, 0, %s25
    %s28 = ssub.s32 %s15, %s27
    %s29 = ssub.s32 %s16, %s23
    %s30 = sor.u32 %s28, %s29
    %p31 = scmp.eq.s32.totalorder %s30, 0
    %s33 = sadd.s32 %s32, 1
    %s34 = scalar_select %p31, %s32, %s33
    %p37 = pneg %p31
    %p38 = scmp.eq.s32.totalorder %s8, 1
    %p39 = por %p37, %p38
    %p40 = scmp.ne.s32.totalorder %s32, %s35
    %p41 = scmp.eq.s32.totalorder %s8, 0
    %p42 = por %p40, %p41
    %p43 = scmp.ne.s32.totalorder %s32, %s35
    %p44 = scmp.eq.s32.totalorder %s13, 1
    %p45 = por %p43, %p44
    %p46 = scmp.ne.s32.totalorder %s35, %s36
    %p47 = scmp.eq.s32.totalorder %s13, 0
    %p48 = por %p46, %p47
    %p49 = scmp.ne.s32.totalorder %s35, %s36
    %p50 = scmp.eq.s32.totalorder %s14, 1
    %p51 = por %p49, %p50
    %p53 = scmp.ne.s32.totalorder %s36, %s52
    %p54 = scmp.eq.s32.totalorder %s14, 0
    %p55 = por %p53, %p54
    %s57 = sadd.s32 %s56, 1
    %p60 = scmp.eq.s32.totalorder %s8, 1
    %p61 = scmp.ne.s32.totalorder %s56, %s58
    %p62 = scmp.eq.s32.totalorder %s8, 0
    %p63 = por %p61, %p62
    %p64 = scmp.ne.s32.totalorder %s56, %s58
    %p65 = scmp.eq.s32.totalorder %s13, 1
    %p66 = por %p64, %p65
    %p67 = scmp.ne.s32.totalorder %s58, %s59
    %p68 = scmp.eq.s32.totalorder %s13, 0
    %p69 = por %p67, %p68
    %p70 = scmp.ne.s32.totalorder %s58, %s59
    %p71 = scmp.eq.s32.totalorder %s14, 1
    %p72 = por %p70, %p71
    %p74 = scmp.ne.s32.totalorder %s59, %s73
    %p75 = scmp.eq.s32.totalorder %s14, 0
    %p76 = por %p74, %p75
    %s77 = ssub.s32 %s15, %s27
    %s78 = ssub.s32 %s16, %s23
    %s79 = sor.u32 %s77, %s78
    %p80 = scmp.eq.s32.totalorder %s79, 0
    %s82 = sadd.s32 %s81, 1
    %s83 = scalar_select %p80, %s81, %s82
    %p86 = pneg %p80
    %p87 = scmp.eq.s32.totalorder %s8, 1
    %p88 = por %p86, %p87
    %p89 = scmp.ne.s32.totalorder %s81, %s84
    %p90 = scmp.eq.s32.totalorder %s8, 0
    %p91 = por %p89, %p90
    %p92 = scmp.ne.s32.totalorder %s81, %s84
    %p93 = scmp.eq.s32.totalorder %s13, 1
    %p94 = por %p92, %p93
    %p95 = scmp.ne.s32.totalorder %s84, %s85
    %p96 = scmp.eq.s32.totalorder %s13, 0
    %p97 = por %p95, %p96
    %p98 = scmp.ne.s32.totalorder %s84, %s85
    %p99 = scmp.eq.s32.totalorder %s14, 1
    %p100 = por %p98, %p99
    %p102 = scmp.ne.s32.totalorder %s85, %s101
    %p103 = scmp.eq.s32.totalorder %s14, 0
    %p104 = por %p102, %p103
    %p105 = scmp.le.s32.totalorder 1, %s8
    %p106 = scmp.lt.s32.totalorder %s8, 3
    %p107 = pnand %p105, %p106
    %p108 = pneg %p107
    // Predicated region
    $region9: #{snn_head_forward.2} parent=5 // pred_check
      _
    $region10: #{snn_head_forward.2} parent=5 // pred_check_branch
      %110 = sbr.rel (%p107) target = $region12
    $region11: #{snn_head_forward.2} parent=5 // pred_region
      %s111 = ssub.s32 %s8, 1
      // Predicated region
      $region13: #{snn_head_forward.2} parent=11 // pred_check
        %p112 = pneg %p69
      $region14: #{snn_head_forward.2} parent=11 // pred_check_branch
        %114 = sbr.rel (%p112) target = $region16
      $region15: #{snn_head_forward.2} parent=11 // pred_region
        _
      $region16: #{snn_head_forward.2} parent=11 // pred_fallthru
        _
    $region12: #{snn_head_forward.2} parent=5 // pred_fallthru
      _
    %p115 = scmp.lt.s32.totalorder %s8, 2
    // Predicated region
    $region17: #{snn_head_forward.2} parent=5 // pred_check
      %p116 = pneg %p115
    $region18: #{snn_head_forward.2} parent=5 // pred_check_branch
      %118 = sbr.rel (%p116) target = $region20
    $region19: #{snn_head_forward.2} parent=5 // pred_region
      // Predicated region
      $region21: #{snn_head_forward.2} parent=19 // pred_check
        %p119 = pneg %p42
      $region22: #{snn_head_forward.2} parent=19 // pred_check_branch
        %121 = sbr.rel (%p119) target = $region24
      $region23: #{snn_head_forward.2} parent=19 // pred_region
        %s122 = smul.u32 2, %s16
        %p123 = scmp.lt.s32.totalorder %s15, 1
        %s124 = scalar_select %p123, %s15, 1
        %p125 = scmp.lt.s32.totalorder %s122, 1
        %s126 = scalar_select %p125, %s122, 1
        %s127 = smul.addr %s124, 2
        %s128 = sadd.s32 %s126, %s127
        %s129 = smul.addr %s128, 8
        %s130 = scalar_lea.vmem %s0, %s129
        %s131 = smul.u32 2, %s16
      $region24: #{snn_head_forward.2} parent=19 // pred_fallthru
        _
    $region20: #{snn_head_forward.2} parent=5 // pred_fallthru
      _
    %p132 = scmp.le.s32.totalorder 1, %s8
    %p133 = scmp.lt.s32.totalorder %s8, 3
    %p134 = pnand %p132, %p133
    %p135 = pneg %p134
    // Predicated region
    $region25: #{snn_head_forward.2} parent=5 // pred_check
      _
    $region26: #{snn_head_forward.2} parent=5 // pred_check_branch
      %137 = sbr.rel (%p134) target = $region28
    $region27: #{snn_head_forward.2} parent=5 // pred_region
      %s138 = ssub.s32 %s8, 1
      %s139 = smul.u32 2, %s18
      %p140 = scmp.lt.s32.totalorder %s17, 1
      %s141 = scalar_select %p140, %s17, 1
      %p142 = scmp.lt.s32.totalorder %s139, 1
      %s143 = scalar_select %p142, %s139, 1
      %s144 = smul.addr %s141, 2
      %s145 = sadd.s32 %s143, %s144
      %s146 = smul.addr %s145, 8
      %s147 = scalar_lea.vmem %s0, %s146
      %p148 = pneg %p48
      %p149 = pneg %p45
      %p150 = pneg %p69
      %p151 = pneg %p66
      %p152 = pneg %p97
      %p153 = pneg %p94
      %s154 = smul.u32 2, %s18
      %p155 = scmp.lt.s32.totalorder %s17, 1
      %s156 = scalar_select %p155, %s17, 1
      %p157 = scmp.lt.s32.totalorder %s154, 1
      %s158 = scalar_select %p157, %s154, 1
      %s159 = smul.addr %s156, 2
      %s160 = sadd.s32 %s158, %s159
      %s161 = smul.addr %s160, 2
      %s162 = scalar_lea.vmem %s2, %s161
      %s163 = smul.u32 2, %s18
      %p164 = scmp.lt.s32.totalorder %s17, 1
      %s165 = scalar_select %p164, %s17, 1
      %p166 = scmp.lt.s32.totalorder %s163, 1
      %s167 = scalar_select %p166, %s163, 1
      %s168 = smul.addr %s165, 2
      %s169 = sadd.s32 %s167, %s168
      %s170 = smul.addr %s169, 8
      %s171 = scalar_lea.vmem %s0, %s170
      %s172 = smul.u32 2, %s18
      %s173 = smul.u32 2, %s18
      %p174 = scmp.lt.s32.totalorder %s17, 1
      %s175 = scalar_select %p174, %s17, 1
      %p176 = scmp.lt.s32.totalorder %s173, 1
      %s177 = scalar_select %p176, %s173, 1
      %s178 = smul.addr %s175, 2
      %s179 = sadd.s32 %s177, %s178
      %s180 = smul.addr %s179, 2
      %s181 = scalar_lea.vmem %s2, %s180
      %s182 = smul.u32 2, %s18
      %v184 = vld [vmem:[%s171] sm:$0xff]
      %v185 = vld [vmem:[%s171 + $0x8] sm:$0xff]
      %v186 = vpack.c.bf16 %v184, %v184
      %v187 = vpack.c.bf16 %v185, %v185
      %v188 = vld [vmem:[%s1] sm:$0x3]
      %vm189 = vcmask 64512
      %v191 = vsel %vm189, %v188, 0
      %vm193 = vcmask 1043456
      %v195 = vsel %vm193, %v186, 0
      %v198 = vsel %vm193, %v187, 0
      %200 = vmatprep.subr.bf16.mxu0 0
      %201 = vmatpush1.bf16.msra.mxu0 0
      %202 = vmatprep.subr.bf16.mxu0 0
      %203 = vmatpush1.bf16.msra.mxu0 0
      %204 = vmatprep.subr.bf16.mxu0 0
      %205 = vmatpush1.bf16.msra.mxu0 0
      %206 = vmatprep.subr.bf16.mxu0 0
      %207 = vmatpush1.bf16.msra.mxu0 0
      %208 = vmatprep.subr.bf16.mxu0 0
      %209 = vmatpush1.bf16.msra.mxu0 0
      %210 = vmatprep.subr.bf16.mxu0 0
      %211 = vmatpush1.bf16.msra.mxu0 0
      %212 = vmatprep.subr.bf16.mxu0 0
      %213 = vmatpush1.bf16.msra.mxu0 0
      %214 = vmatprep.subr.bf16.mxu0 %v198
      %215 = vmatpush1.bf16.msra.mxu0 %v195
      %216 = vmatprep.subr.bf16.mxu0 0
      %217 = vmatpush2.bf16.msra.mxu0 0
      %218 = vmatprep.subr.bf16.mxu0 0
      %219 = vmatpush2.bf16.msra.mxu0 0
      %220 = vmatprep.subr.bf16.mxu0 0
      %221 = vmatpush2.bf16.msra.mxu0 0
      %222 = vmatprep.subr.bf16.mxu0 0
      %223 = vmatpush2.bf16.msra.mxu0 0
      %224 = vmatprep.subr.bf16.mxu0 0
      %225 = vmatpush2.bf16.msra.mxu0 0
      %226 = vmatprep.subr.bf16.mxu0 0
      %227 = vmatpush2.bf16.msra.mxu0 0
      %228 = vmatprep.subr.bf16.mxu0 0
      %229 = vmatpush2.bf16.msra.mxu0 0
      %230 = vmatprep.subr.bf16.mxu0 0
      %231 = vmatpush2.bf16.msra.mxu0 0
      %232 = vmatprep.mubr.bf16.mxu0 0
      %233 = vmatmul.mubr.bf16.gmra.mxu0 %v191
      %v234 = vpop.f32.mrf.mxu0
      %v235 = vadd.f32 0.0, %v234
      %v236 = vpop.f32.mrf.mxu0
      %v237 = vadd.f32 0.0, %v236
      %v238 = vpop.f32.mrf.mxu0
      %v239 = vpop.f32.mrf.mxu0
      %240 = vdwg.mxu0
      %v241 = vsub.f32 %v235, 1.0
      %v242 = vsub.f32 %v237, 1.0
      %vm243 = vcmp.gt.f32.partialorder %v235, 1.0
      %vm244 = vcmp.gt.f32.partialorder %v237, 1.0
      %v245 = vsel %vm243, 1, 0
      %v246 = vsel %vm244, 1, 0
      %v247 = vcvt.s32.f32 %v245
      %v248 = vcvt.s32.f32 %v246
      %v249 = vmax.f32 %v235, -5.0
      %v250 = vmax.f32 %v237, -5.0
      %v251 = vmin.f32 %v249, 5.0
      %v252 = vmin.f32 %v250, 5.0
      %v253 = vmul.f32 %v251, 0.9
      %v254 = vmul.f32 %v252, 0.9
      %v255 = vsel %vm243, %v241, %v235
      %v256 = vsel %vm244, %v242, %v237
      %v257 = vadd.f32 %v253, %v255
      %v258 = vadd.f32 %v254, %v256
      %vm259 = vcmp.gt.f32.partialorder %v257, 1.0
      %vm260 = vcmp.gt.f32.partialorder %v258, 1.0
      %v261 = vsel %vm259, 1, 0
      %v262 = vsel %vm260, 1, 0
      %v263 = vcvt.s32.f32 %v261
      %v264 = vcvt.s32.f32 %v262
      %v265 = vadd.f32 %v247, %v263
      %v266 = vadd.f32 %v248, %v264
      %v267 = vmul.f32 %v265, 0.5
      %v268 = vmul.f32 %v266, 0.5
      %v269 = vpack.c.bf16 %v267, %v267
      %v270 = vpack.c.bf16 %v268, %v268
      %v273 = vcombine.low %v269, %v270
      %v275 = vunpack.c.l.s4 1983009808
      %v276 = vunpack.c.0.s8 %v275
      %v277 = vlaneseq
      %v278 = vshrl.u32 %v277, 7
      %v279 = vsub.s32 %v276, %v278
      %v280 = vrot.slane %v273, %v279
      %282 = vst [vmem:[%s181] sm:$0xf] %v280
      %s283 = smul.u32 2, %s18
      %p284 = scmp.lt.s32.totalorder %s17, 1
      %s285 = scalar_select %p284, %s17, 1
      %p286 = scmp.lt.s32.totalorder %s283, 1
      %s287 = scalar_select %p286, %s283, 1
      %s288 = smul.addr %s285, 2
      %s289 = sadd.s32 %s287, %s288
      %s290 = smul.addr %s289, 2
      %s291 = scalar_lea.vmem %s2, %s290
      // Predicated region
      $region29: #{snn_head_forward.2} parent=27 // pred_check
        %p292 = pneg %p94
      $region30: #{snn_head_forward.2} parent=27 // pred_check_branch
        %294 = sbr.rel (%p292) target = $region32
      $region31: #{snn_head_forward.2} parent=27 // pred_region
        %s295 = smul.u32 2, %s18
      $region32: #{snn_head_forward.2} parent=27 // pred_fallthru
        _
    $region28: #{snn_head_forward.2} parent=5 // pred_fallthru
      _
    %p296 = scmp.le.s32.totalorder 2, %s8
    // Predicated region
    $region33: #{snn_head_forward.2} parent=5 // pred_check
      %p297 = pneg %p296
    $region34: #{snn_head_forward.2} parent=5 // pred_check_branch
      %299 = sbr.rel (%p297) target = $region36
    $region35: #{snn_head_forward.2} parent=5 // pred_region
      %s300 = ssub.s32 %s8, 2
      // Predicated region
      $region37: #{snn_head_forward.2} parent=35 // pred_check
        %p301 = pneg %p100
      $region38: #{snn_head_forward.2} parent=35 // pred_check_branch
        %303 = sbr.rel (%p301) target = $region40
      $region39: #{snn_head_forward.2} parent=35 // pred_region
        %s304 = smul.u32 2, %s20
        %p305 = scmp.lt.s32.totalorder %s19, 1
        %s306 = scalar_select %p305, %s19, 1
        %p307 = scmp.lt.s32.totalorder %s304, 1
        %s308 = scalar_select %p307, %s304, 1
        %s309 = smul.addr %s306, 2
        %s310 = sadd.s32 %s308, %s309
        %s311 = smul.addr %s310, 2
        %s312 = scalar_lea.vmem %s2, %s311
      $region40: #{snn_head_forward.2} parent=35 // pred_fallthru
        _
    $region36: #{snn_head_forward.2} parent=5 // pred_fallthru
      _
  $region6: #{snn_head_forward.2} parent=0 // loop_footer
    %s12 = sadd.s32 1, %s8
  $region7: #{snn_head_forward.2} parent=0 // loop_footer_branch
    %7 = sbr.rel target = $region3
  $region8: #{snn_head_forward.2} parent=0 // loop_exit
    _

// kernel: snn_head_forward.3
$region0: #{snn_head_forward.3}
  #allocation0 [shape = 'u32[]', space=smem, size = 0x4, offset = 0x4, fixed_abs, tag = 'smem constant byte address 0x4 - core index']
  #allocation1 [shape = 'u32[144,128]{1,0:T(1,128)}', space=vmem, size = 0x12000, scoped, tag = 'internal scratch']
  %s0 = inlined_call_operand.vmem [shape: bf16[2,4,16,16], index: 0, kind: input, shape index: {}]
  %s1 = inlined_call_operand.vmem [shape: bf16[64,16], index: 1, kind: input, shape index: {}]
  %s2 = inlined_call_operand.vmem [shape: bf16[16,64], index: 2, kind: input, shape index: {}]
  %s3 = inlined_call_operand.hbm [shape: f32[2,4,64,64], index: 3, kind: output, shape index: {}]
  %s4 = sld [smem:[#allocation0]]
  $region45: #{snn_head_forward.3} parent=0
    _
  %s6 = ssub.s32 1, %s4
  %s7 = scalar_select 0, %s6, %s4
  $region1: #{snn_head_forward.3} parent=0
    #allocation2 [shape = 'u8[262144]{0}', space=vmem, size = 0x40000, scoped, tag = 'output window, operand 0']
    #allocation3 [shape = 's32[2]{0}', space=sflag, size = 0x8, scoped, tag = 'scoped memory for snn_head_forward.3']
    %8 = vsyncpa [#allocation3], 0
    %s9 = scalar_lea.sflag [#allocation3], 1
    %10 = vsyncpa %s9, 0
    loop: start=0, step=1, limit=4
    $region2: #{snn_head_forward.3} parent=1 // loop_pre_header
      _
    $region3: #{snn_head_forward.3} parent=1 // loop_header
      %s12 = sphi 0, %s16
      %p13 = scmp.ge.s32.totalorder %s12, 4
      %s22 = sphi 0, %s24
      %s25 = sphi 0, %s22
      %s26 = sphi 0, %s25
      %s42 = sphi 0, %s26
      %s46 = sphi 0, %s46
      %s48 = sphi 0, %s46
      %s49 = sphi 0, %s48
      %s63 = sphi 0, %s49
      %s67 = sphi 0, %s67
      %s69 = sphi 0, %s67
      %s70 = sphi 0, %s69
      %s84 = sphi 0, %s70
      %s90 = sphi 0, %s92
      %s93 = sphi 0, %s90
      %s94 = sphi 0, %s93
      %s110 = sphi 0, %s94
    $region4: #{snn_head_forward.3} parent=1 // loop_header_branch
      %15 = sbr.rel (%p13) target = $region8
    $region5: #{snn_head_forward.3} parent=1 // loop_body
      %s17 = ssub.s32 %s12, 1
      %s18 = ssub.s32 %s12, 2
      %s19 = sadd.s32 %s12, 1
      %s20 = ssub.s32 %s12, %s19
      %p21 = scmp.eq.s32.totalorder %s20, 0
      %s23 = sadd.s32 %s22, 1
      %s24 = scalar_select %p21, %s22, %s23
      %p27 = pneg %p21
      %p28 = scmp.eq.s32.totalorder %s12, 1
      %p29 = por %p27, %p28
      %p30 = scmp.ne.s32.totalorder %s22, %s25
      %p31 = scmp.eq.s32.totalorder %s12, 0
      %p32 = por %p30, %p31
      %p33 = scmp.ne.s32.totalorder %s22, %s25
      %p34 = scmp.eq.s32.totalorder %s17, 1
      %p35 = por %p33, %p34
      %p36 = scmp.ne.s32.totalorder %s25, %s26
      %p37 = scmp.eq.s32.totalorder %s17, 0
      %p38 = por %p36, %p37
      %p39 = scmp.ne.s32.totalorder %s25, %s26
      %p40 = scmp.eq.s32.totalorder %s18, 1
      %p41 = por %p39, %p40
      %p43 = scmp.ne.s32.totalorder %s26, %s42
      %p44 = scmp.eq.s32.totalorder %s18, 0
      %p45 = por %p43, %p44
      %s47 = sadd.s32 %s46, 1
      %p50 = scmp.eq.s32.totalorder %s12, 1
      %p51 = scmp.ne.s32.totalorder %s46, %s48
      %p52 = scmp.eq.s32.totalorder %s12, 0
      %p53 = por %p51, %p52
      %p54 = scmp.ne.s32.totalorder %s46, %s48
      %p55 = scmp.eq.s32.totalorder %s17, 1
      %p56 = por %p54, %p55
      %p57 = scmp.ne.s32.totalorder %s48, %s49
      %p58 = scmp.eq.s32.totalorder %s17, 0
      %p59 = por %p57, %p58
      %p60 = scmp.ne.s32.totalorder %s48, %s49
      %p61 = scmp.eq.s32.totalorder %s18, 1
      %p62 = por %p60, %p61
      %p64 = scmp.ne.s32.totalorder %s49, %s63
      %p65 = scmp.eq.s32.totalorder %s18, 0
      %p66 = por %p64, %p65
      %s68 = sadd.s32 %s67, 1
      %p71 = scmp.eq.s32.totalorder %s12, 1
      %p72 = scmp.ne.s32.totalorder %s67, %s69
      %p73 = scmp.eq.s32.totalorder %s12, 0
      %p74 = por %p72, %p73
      %p75 = scmp.ne.s32.totalorder %s67, %s69
      %p76 = scmp.eq.s32.totalorder %s17, 1
      %p77 = por %p75, %p76
      %p78 = scmp.ne.s32.totalorder %s69, %s70
      %p79 = scmp.eq.s32.totalorder %s17, 0
      %p80 = por %p78, %p79
      %p81 = scmp.ne.s32.totalorder %s69, %s70
      %p82 = scmp.eq.s32.totalorder %s18, 1
      %p83 = por %p81, %p82
      %p85 = scmp.ne.s32.totalorder %s70, %s84
      %p86 = scmp.eq.s32.totalorder %s18, 0
      %p87 = por %p85, %p86
      %s88 = ssub.s32 %s12, %s19
      %p89 = scmp.eq.s32.totalorder %s88, 0
      %s91 = sadd.s32 %s90, 1
      %s92 = scalar_select %p89, %s90, %s91
      %p95 = pneg %p89
      %p96 = scmp.eq.s32.totalorder %s12, 1
      %p97 = por %p95, %p96
      %p98 = scmp.ne.s32.totalorder %s90, %s93
      %p99 = scmp.eq.s32.totalorder %s12, 0
      %p100 = por %p98, %p99
      %p101 = scmp.ne.s32.totalorder %s90, %s93
      %p102 = scmp.eq.s32.totalorder %s17, 1
      %p103 = por %p101, %p102
      %p104 = scmp.ne.s32.totalorder %s93, %s94
      %p105 = scmp.eq.s32.totalorder %s17, 0
      %p106 = por %p104, %p105
      %p107 = scmp.ne.s32.totalorder %s93, %s94
      %p108 = scmp.eq.s32.totalorder %s18, 1
      %p109 = por %p107, %p108
      %p111 = scmp.ne.s32.totalorder %s94, %s110
      %p112 = scmp.eq.s32.totalorder %s18, 0
      %p113 = por %p111, %p112
      %p114 = scmp.le.s32.totalorder 1, %s12
      %p115 = scmp.lt.s32.totalorder %s12, 3
      %p116 = pnand %p114, %p115
      %p117 = pneg %p116
      // Predicated region
      $region9: #{snn_head_forward.3} parent=5 // pred_check
        _
      $region10: #{snn_head_forward.3} parent=5 // pred_check_branch
        %119 = sbr.rel (%p116) target = $region12
      $region11: #{snn_head_forward.3} parent=5 // pred_region
        %s120 = ssub.s32 %s12, 1
        // Predicated region
        $region13: #{snn_head_forward.3} parent=11 // pred_check
          %p121 = pneg %p59
        $region14: #{snn_head_forward.3} parent=11 // pred_check_branch
          %123 = sbr.rel (%p121) target = $region16
        $region15: #{snn_head_forward.3} parent=11 // pred_region
          _
        $region16: #{snn_head_forward.3} parent=11 // pred_fallthru
          _
        // Predicated region
        $region17: #{snn_head_forward.3} parent=11 // pred_check
          %p124 = pneg %p80
        $region18: #{snn_head_forward.3} parent=11 // pred_check_branch
          %126 = sbr.rel (%p124) target = $region20
        $region19: #{snn_head_forward.3} parent=11 // pred_region
          _
        $region20: #{snn_head_forward.3} parent=11 // pred_fallthru
          _
      $region12: #{snn_head_forward.3} parent=5 // pred_fallthru
        _
      %p127 = scmp.lt.s32.totalorder %s12, 2
      // Predicated region
      $region21: #{snn_head_forward.3} parent=5 // pred_check
        %p128 = pneg %p127
      $region22: #{snn_head_forward.3} parent=5 // pred_check_branch
        %130 = sbr.rel (%p128) target = $region24
      $region23: #{snn_head_forward.3} parent=5 // pred_region
        // Predicated region
        $region25: #{snn_head_forward.3} parent=23 // pred_check
          %p131 = pneg %p32
        $region26: #{snn_head_forward.3} parent=23 // pred_check_branch
          %133 = sbr.rel (%p131) target = $region28
        $region27: #{snn_head_forward.3} parent=23 // pred_region
          %p134 = scmp.lt.s32.totalorder %s12, 1
          %s135 = scalar_select %p134, %s12, 1
          %s136 = smul.addr %s135, 8
          %s137 = smul.addr %s136, 4
          %s138 = scalar_lea.vmem %s0, %s137
        $region28: #{snn_head_forward.3} parent=23 // pred_fallthru
          _
      $region24: #{snn_head_forward.3} parent=5 // pred_fallthru
        _
      %p139 = scmp.le.s32.totalorder 1, %s12
      %p140 = scmp.lt.s32.totalorder %s12, 3
      %p141 = pnand %p139, %p140
      %p142 = pneg %p141
      // Predicated region
      $region29: #{snn_head_forward.3} parent=5 // pred_check
        _
      $region30: #{snn_head_forward.3} parent=5 // pred_check_branch
        %144 = sbr.rel (%p141) target = $region32
      $region31: #{snn_head_forward.3} parent=5 // pred_region
        %s145 = ssub.s32 %s12, 1
        %p146 = scmp.lt.s32.totalorder %s17, 1
        %s147 = scalar_select %p146, %s17, 1
        %s148 = smul.addr %s147, 8
        %s149 = smul.addr %s148, 4
        %s150 = scalar_lea.vmem %s0, %s149
        %p151 = pneg %p38
        %p152 = pneg %p35
        %p153 = pneg %p59
        %p154 = pneg %p56
        %p155 = pneg %p80
        %p156 = pneg %p77
        %p157 = pneg %p106
        %p158 = pneg %p103
        %s159 = sand.u32 %s93, 1
        %s160 = scalar_lea.sflag [#allocation3], %s159
        %s161 = sand.u32 %s93, 1
        %s162 = smul.addr %s161, 256
        %s163 = scalar_lea.vmem [#allocation2], %s162
        %p164 = scmp.lt.s32.totalorder %s17, 1
        %s165 = scalar_select %p164, %s17, 1
        %s166 = smul.addr %s165, 8
        %s167 = smul.addr %s166, 4
        %s168 = scalar_lea.vmem %s0, %s167
        %v170 = vld [vmem:[%s1] sm:$0xf]
        %v171 = vld [vmem:[%s1 + $0x4] sm:$0xf]
        %v172 = vld [vmem:[%s1 + $0x8] sm:$0xf]
        %v173 = vld [vmem:[%s1 + $0xc] sm:$0xf]
        %v174 = vld [vmem:[%s1 + $0x10] sm:$0xf]
        %v175 = vld [vmem:[%s1 + $0x14] sm:$0xf]
        %v176 = vld [vmem:[%s1 + $0x18] sm:$0xf]
        %v177 = vld [vmem:[%s1 + $0x1c] sm:$0xf]
        %v178 = vld [vmem:[%s2] sm:$0xf]
        %v179 = vld [vmem:[%s2 + $0x4] sm:$0xf]
        %v180 = vld [vmem:[%s168] sm:$0xf]
        %v181 = vld [vmem:[%s168 + $0x4] sm:$0xf]
        %v190 = vunpack.c.l.b16 %v170
        %v191 = vunpack.c.l.b16 %v171
        %v192 = vunpack.c.l.b16 %v172
        %v193 = vunpack.c.l.b16 %v173
        %v194 = vunpack.c.l.b16 %v174
        %v195 = vunpack.c.l.b16 %v175
        %v196 = vunpack.c.l.b16 %v176
        %v197 = vunpack.c.l.b16 %v177
        %v198 = vpack.c.b16 %v191, %v190
        %v199 = vpack.c.b16 %v193, %v192
        %v200 = vpack.c.b16 %v195, %v194
        %v201 = vpack.c.b16 %v197, %v196
        %v204 = vunpack.c.l.b16 %v180
        %v205 = vunpack.c.l.b16 %v181
        %v206 = vpack.c.b16 %v205, %v204
        %vm208 = vcmask 130048
        %v210 = vsel %vm208, %v198, 0
        %v213 = vsel %vm208, %v199, 0
        %v216 = vsel %vm208, %v200, 0
        %v219 = vsel %vm208, %v201, 0
        %221 = vmatprep.subr.bf16.mxu0 0
        %222 = vmatpush1.bf16.msra.mxu0 0
        %223 = vmatprep.subr.bf16.mxu0 0
        %224 = vmatpush1.bf16.msra.mxu0 0
        %225 = vmatprep.subr.bf16.mxu0 0
        %226 = vmatpush1.bf16.msra.mxu0 0
        %227 = vmatprep.subr.bf16.mxu0 0
        %228 = vmatpush1.bf16.msra.mxu0 0
        %229 = vmatprep.subr.bf16.mxu0 0
        %230 = vmatpush1.bf16.msra.mxu0 0
        %231 = vmatprep.subr.bf16.mxu0 0
        %232 = vmatpush1.bf16.msra.mxu0 0
        %233 = vmatprep.subr.bf16.mxu0 0
        %234 = vmatpush1.bf16.msra.mxu0 0
        %235 = vmatprep.subr.bf16.mxu0 0
        %236 = vmatpush1.bf16.msra.mxu0 %v206
        %237 = vmatprep.subr.bf16.mxu0 0
        %238 = vmatpush2.bf16.msra.mxu0 0
        %239 = vmatprep.subr.bf16.mxu0 0
        %240 = vmatpush2.bf16.msra.mxu0 0
        %241 = vmatprep.subr.bf16.mxu0 0
        %242 = vmatpush2.bf16.msra.mxu0 0
        %243 = vmatprep.subr.bf16.mxu0 0
        %244 = vmatpush2.bf16.msra.mxu0 0
        %245 = vmatprep.subr.bf16.mxu0 0
        %246 = vmatpush2.bf16.msra.mxu0 0
        %247 = vmatprep.subr.bf16.mxu0 0
        %248 = vmatpush2.bf16.msra.mxu0 0
        %249 = vmatprep.subr.bf16.mxu0 0
        %250 = vmatpush2.bf16.msra.mxu0 0
        %251 = vmatprep.subr.bf16.mxu0 0
        %252 = vmatpush2.bf16.msra.mxu0 0
        %253 = vmatprep.mubr.bf16.mxu0 0
        %254 = vmatmul.mubr.bf16.gmra.mxu0 %v210
        %v255 = vpop.f32.mrf.mxu0
        %v256 = vadd.f32 0.0, %v255
        %v257 = vpop.f32.mrf.mxu0
        %v258 = vpop.f32.mrf.mxu0
        %v259 = vadd.f32 0.0, %v258
        %v260 = vpop.f32.mrf.mxu0
        %261 = vmatprep.mubr.bf16.mxu0 0
        %262 = vmatmul.mubr.bf16.gmra.mxu0 %v213
        %v263 = vpop.f32.mrf.mxu0
        %v264 = vadd.f32 0.0, %v263
        %v265 = vpop.f32.mrf.mxu0
        %v266 = vpop.f32.mrf.mxu0
        %v267 = vadd.f32 0.0, %v266
        %v268 = vpop.f32.mrf.mxu0
        %269 = vmatprep.mubr.bf16.mxu0 0
        %270 = vmatmul.mubr.bf16.gmra.mxu0 %v216
        %v271 = vpop.f32.mrf.mxu0
        %v272 = vadd.f32 0.0, %v271
        %v273 = vpop.f32.mrf.mxu0
        %v274 = vpop.f32.mrf.mxu0
        %v275 = vadd.f32 0.0, %v274
        %v276 = vpop.f32.mrf.mxu0
        %277 = vmatprep.mubr.bf16.mxu0 0
        %278 = vmatmul.mubr.bf16.gmra.mxu0 %v219
        %v279 = vpop.f32.mrf.mxu0
        %v280 = vadd.f32 0.0, %v279
        %v281 = vpop.f32.mrf.mxu0
        %v282 = vpop.f32.mrf.mxu0
        %v283 = vadd.f32 0.0, %v282
        %v284 = vpop.f32.mrf.mxu0
        %285 = vdwg.mxu0
        %v286 = vpack.c.bf16 %v259, %v256
        %v287 = vpack.c.bf16 %v267, %v264
        %v288 = vpack.c.bf16 %v275, %v272
        %v289 = vpack.c.bf16 %v283, %v280
        %v292 = vunpack.c.l.b16 %v178
        %v293 = vunpack.c.l.b16 %v179
        %v294 = vpack.c.b16 %v293, %v292
        %v297 = vsel %vm208, %v286, 0
        %v300 = vsel %vm208, %v287, 0
        %v303 = vsel %vm208, %v288, 0
        %v306 = vsel %vm208, %v289, 0
        %308 = vmatprep.subr.bf16.mxu0 0
        %309 = vmatpush1.bf16.msra.mxu0 0
        %310 = vmatprep.subr.bf16.mxu0 0
        %311 = vmatpush1.bf16.msra.mxu0 0
        %312 = vmatprep.subr.bf16.mxu0 0
        %313 = vmatpush1.bf16.msra.mxu0 0
        %314 = vmatprep.subr.bf16.mxu0 0
        %315 = vmatpush1.bf16.msra.mxu0 0
        %316 = vmatprep.subr.bf16.mxu0 0
        %317 = vmatpush1.bf16.msra.mxu0 0
        %318 = vmatprep.subr.bf16.mxu0 0
        %319 = vmatpush1.bf16.msra.mxu0 0
        %320 = vmatprep.subr.bf16.mxu0 0
        %321 = vmatpush1.bf16.msra.mxu0 0
        %322 = vmatprep.subr.bf16.mxu0 0
        %323 = vmatpush1.bf16.msra.mxu0 %v294
        %324 = vmatprep.subr.bf16.mxu0 0
        %325 = vmatpush2.bf16.msra.mxu0 0
        %326 = vmatprep.subr.bf16.mxu0 0
        %327 = vmatpush2.bf16.msra.mxu0 0
        %328 = vmatprep.subr.bf16.mxu0 0
        %329 = vmatpush2.bf16.msra.mxu0 0
        %330 = vmatprep.subr.bf16.mxu0 0
        %331 = vmatpush2.bf16.msra.mxu0 0
        %332 = vmatprep.subr.bf16.mxu0 0
        %333 = vmatpush2.bf16.msra.mxu0 0
        %334 = vmatprep.subr.bf16.mxu0 0
        %335 = vmatpush2.bf16.msra.mxu0 0
        %336 = vmatprep.subr.bf16.mxu0 0
        %337 = vmatpush2.bf16.msra.mxu0 0
        %338 = vmatprep.subr.bf16.mxu0 0
        %339 = vmatpush2.bf16.msra.mxu0 0
        %340 = vmatprep.mubr.bf16.mxu0 0
        %341 = vmatmul.mubr.bf16.gmra.mxu0 %v297
        %v342 = vpop.f32.mrf.mxu0
        %v343 = vadd.f32 0.0, %v342
        %v344 = vpop.f32.mrf.mxu0
        %v345 = vpop.f32.mrf.mxu0
        %v346 = vadd.f32 0.0, %v345
        %v347 = vpop.f32.mrf.mxu0
        %348 = vmatprep.mubr.bf16.mxu0 0
        %349 = vmatmul.mubr.bf16.gmra.mxu0 %v300
        %v350 = vpop.f32.mrf.mxu0
        %v351 = vadd.f32 0.0, %v350
        %v352 = vpop.f32.mrf.mxu0
        %v353 = vpop.f32.mrf.mxu0
        %v354 = vadd.f32 0.0, %v353
        %v355 = vpop.f32.mrf.mxu0
        %356 = vmatprep.mubr.bf16.mxu0 0
        %357 = vmatmul.mubr.bf16.gmra.mxu0 %v303
        %v358 = vpop.f32.mrf.mxu0
        %v359 = vadd.f32 0.0, %v358
        %v360 = vpop.f32.mrf.mxu0
        %v361 = vpop.f32.mrf.mxu0
        %v362 = vadd.f32 0.0, %v361
        %v363 = vpop.f32.mrf.mxu0
        %364 = vmatprep.mubr.bf16.mxu0 0
        %365 = vmatmul.mubr.bf16.gmra.mxu0 %v306
        %v366 = vpop.f32.mrf.mxu0
        %v367 = vadd.f32 0.0, %v366
        %v368 = vpop.f32.mrf.mxu0
        %v369 = vpop.f32.mrf.mxu0
        %v370 = vadd.f32 0.0, %v369
        %v371 = vpop.f32.mrf.mxu0
        %372 = vdwg.mxu0
        %vm373 = vcmask 523264
        %374 = vst.msk [vmem:[%s163] sm:$0xff] %vm373, %v343
        %375 = vst.msk [vmem:[%s163 + $0x8] sm:$0xff] %vm373, %v346
        %376 = vst.msk [vmem:[%s163 + $0x10] sm:$0xff] %vm373, %v351
        %377 = vst.msk [vmem:[%s163 + $0x18] sm:$0xff] %vm373, %v354
        %378 = vst.msk [vmem:[%s163 + $0x20] sm:$0xff] %vm373, %v359
        %379 = vst.msk [vmem:[%s163 + $0x28] sm:$0xff] %vm373, %v362
        %380 = vst.msk [vmem:[%s163 + $0x30] sm:$0xff] %vm373, %v367
        %381 = vst.msk [vmem:[%s163 + $0x38] sm:$0xff] %vm373, %v370
        %s382 = scalar_lea.vmem %s168, 8
        %v383 = vld [vmem:[%s382] sm:$0xf]
        %v384 = vld [vmem:[%s382 + $0x4] sm:$0xf]
        %v387 = vunpack.c.l.b16 %v383
        %v388 = vunpack.c.l.b16 %v384
        %v389 = vpack.c.b16 %v388, %v387
        %391 = vmatprep.subr.bf16.mxu0 0
        %392 = vmatpush1.bf16.msra.mxu0 0
        %393 = vmatprep.subr.bf16.mxu0 0
        %394 = vmatpush1.bf16.msra.mxu0 0
        %395 = vmatprep.subr.bf16.mxu0 0
        %396 = vmatpush1.bf16.msra.mxu0 0
        %397 = vmatprep.subr.bf16.mxu0 0
        %398 = vmatpush1.bf16.msra.mxu0 0
        %399 = vmatprep.subr.bf16.mxu0 0
        %400 = vmatpush1.bf16.msra.mxu0 0
        %401 = vmatprep.subr.bf16.mxu0 0
        %402 = vmatpush1.bf16.msra.mxu0 0
        %403 = vmatprep.subr.bf16.mxu0 0
        %404 = vmatpush1.bf16.msra.mxu0 0
        %405 = vmatprep.subr.bf16.mxu0 0
        %406 = vmatpush1.bf16.msra.mxu0 %v389
        %407 = vmatprep.subr.bf16.mxu0 0
        %408 = vmatpush2.bf16.msra.mxu0 0
        %409 = vmatprep.subr.bf16.mxu0 0
        %410 = vmatpush2.bf16.msra.mxu0 0
        %411 = vmatprep.subr.bf16.mxu0 0
        %412 = vmatpush2.bf16.msra.mxu0 0
        %413 = vmatprep.subr.bf16.mxu0 0
        %414 = vmatpush2.bf16.msra.mxu0 0
        %415 = vmatprep.subr.bf16.mxu0 0
        %416 = vmatpush2.bf16.msra.mxu0 0
        %417 = vmatprep.subr.bf16.mxu0 0
        %418 = vmatpush2.bf16.msra.mxu0 0
        %419 = vmatprep.subr.bf16.mxu0 0
        %420 = vmatpush2.bf16.msra.mxu0 0
        %421 = vmatprep.subr.bf16.mxu0 0
        %422 = vmatpush2.bf16.msra.mxu0 0
        %423 = vmatprep.mubr.bf16.mxu0 0
        %424 = vmatmul.mubr.bf16.gmra.mxu0 %v210
        %v425 = vpop.f32.mrf.mxu0
        %v426 = vadd.f32 0.0, %v425
        %v427 = vpop.f32.mrf.mxu0
        %v428 = vpop.f32.mrf.mxu0
        %v429 = vadd.f32 0.0, %v428
        %v430 = vpop.f32.mrf.mxu0
        %431 = vmatprep.mubr.bf16.mxu0 0
        %432 = vmatmul.mubr.bf16.gmra.mxu0 %v213
        %v433 = vpop.f32.mrf.mxu0
        %v434 = vadd.f32 0.0, %v433
        %v435 = vpop.f32.mrf.mxu0
        %v436 = vpop.f32.mrf.mxu0
        %v437 = vadd.f32 0.0, %v436
        %v438 = vpop.f32.mrf.mxu0
        %439 = vmatprep.mubr.bf16.mxu0 0
        %440 = vmatmul.mubr.bf16.gmra.mxu0 %v216
        %v441 = vpop.f32.mrf.mxu0
        %v442 = vadd.f32 0.0, %v441
        %v443 = vpop.f32.mrf.mxu0
        %v444 = vpop.f32.mrf.mxu0
        %v445 = vadd.f32 0.0, %v444
        %v446 = vpop.f32.mrf.mxu0
        %447 = vmatprep.mubr.bf16.mxu0 0
        %448 = vmatmul.mubr.bf16.gmra.mxu0 %v219
        %v449 = vpop.f32.mrf.mxu0
        %v450 = vadd.f32 0.0, %v449
        %v451 = vpop.f32.mrf.mxu0
        %v452 = vpop.f32.mrf.mxu0
        %v453 = vadd.f32 0.0, %v452
        %v454 = vpop.f32.mrf.mxu0
        %455 = vdwg.mxu0
        %v456 = vpack.c.bf16 %v429, %v426
        %v457 = vpack.c.bf16 %v437, %v434
        %v458 = vpack.c.bf16 %v445, %v442
        %v459 = vpack.c.bf16 %v453, %v450
        %v461 = vsel %vm208, %v456, 0
        %v464 = vsel %vm208, %v457, 0
        %v467 = vsel %vm208, %v458, 0
        %v470 = vsel %vm208, %v459, 0
        %472 = vmatprep.subr.bf16.mxu0 0
        %473 = vmatpush1.bf16.msra.mxu0 0
        %474 = vmatprep.subr.bf16.mxu0 0
        %475 = vmatpush1.bf16.msra.mxu0 0
        %476 = vmatprep.subr.bf16.mxu0 0
        %477 = vmatpush1.bf16.msra.mxu0 0
        %478 = vmatprep.subr.bf16.mxu0 0
        %479 = vmatpush1.bf16.msra.mxu0 0
        %480 = vmatprep.subr.bf16.mxu0 0
        %481 = vmatpush1.bf16.msra.mxu0 0
        %482 = vmatprep.subr.bf16.mxu0 0
        %483 = vmatpush1.bf16.msra.mxu0 0
        %484 = vmatprep.subr.bf16.mxu0 0
        %485 = vmatpush1.bf16.msra.mxu0 0
        %486 = vmatprep.subr.bf16.mxu0 0
        %487 = vmatpush1.bf16.msra.mxu0 %v294
        %488 = vmatprep.subr.bf16.mxu0 0
        %489 = vmatpush2.bf16.msra.mxu0 0
        %490 = vmatprep.subr.bf16.mxu0 0
        %491 = vmatpush2.bf16.msra.mxu0 0
        %492 = vmatprep.subr.bf16.mxu0 0
        %493 = vmatpush2.bf16.msra.mxu0 0
        %494 = vmatprep.subr.bf16.mxu0 0
        %495 = vmatpush2.bf16.msra.mxu0 0
        %496 = vmatprep.subr.bf16.mxu0 0
        %497 = vmatpush2.bf16.msra.mxu0 0
        %498 = vmatprep.subr.bf16.mxu0 0
        %499 = vmatpush2.bf16.msra.mxu0 0
        %500 = vmatprep.subr.bf16.mxu0 0
        %501 = vmatpush2.bf16.msra.mxu0 0
        %502 = vmatprep.subr.bf16.mxu0 0
        %503 = vmatpush2.bf16.msra.mxu0 0
        %504 = vmatprep.mubr.bf16.mxu0 0
        %505 = vmatmul.mubr.bf16.gmra.mxu0 %v461
        %v506 = vpop.f32.mrf.mxu0
        %v507 = vadd.f32 0.0, %v506
        %v508 = vpop.f32.mrf.mxu0
        %v509 = vpop.f32.mrf.mxu0
        %v510 = vadd.f32 0.0, %v509
        %v511 = vpop.f32.mrf.mxu0
        %512 = vmatprep.mubr.bf16.mxu0 0
        %513 = vmatmul.mubr.bf16.gmra.mxu0 %v464
        %v514 = vpop.f32.mrf.mxu0
        %v515 = vadd.f32 0.0, %v514
        %v516 = vpop.f32.mrf.mxu0
        %v517 = vpop.f32.mrf.mxu0
        %v518 = vadd.f32 0.0, %v517
        %v519 = vpop.f32.mrf.mxu0
        %520 = vmatprep.mubr.bf16.mxu0 0
        %521 = vmatmul.mubr.bf16.gmra.mxu0 %v467
        %v522 = vpop.f32.mrf.mxu0
        %v523 = vadd.f32 0.0, %v522
        %v524 = vpop.f32.mrf.mxu0
        %v525 = vpop.f32.mrf.mxu0
        %v526 = vadd.f32 0.0, %v525
        %v527 = vpop.f32.mrf.mxu0
        %528 = vmatprep.mubr.bf16.mxu0 0
        %529 = vmatmul.mubr.bf16.gmra.mxu0 %v470
        %v530 = vpop.f32.mrf.mxu0
        %v531 = vadd.f32 0.0, %v530
        %v532 = vpop.f32.mrf.mxu0
        %v533 = vpop.f32.mrf.mxu0
        %v534 = vadd.f32 0.0, %v533
        %v535 = vpop.f32.mrf.mxu0
        %536 = vdwg.mxu0
        %s537 = scalar_lea.vmem %s163, 64 [#allocation2]
        %538 = vst.msk [vmem:[%s537] sm:$0xff] %vm373, %v507
        %539 = vst.msk [vmem:[%s537 + $0x8] sm:$0xff] %vm373, %v510
        %540 = vst.msk [vmem:[%s537 + $0x10] sm:$0xff] %vm373, %v515
        %541 = vst.msk [vmem:[%s537 + $0x18] sm:$0xff] %vm373, %v518
        %542 = vst.msk [vmem:[%s537 + $0x20] sm:$0xff] %vm373, %v523
        %543 = vst.msk [vmem:[%s537 + $0x28] sm:$0xff] %vm373, %v526
        %544 = vst.msk [vmem:[%s537 + $0x30] sm:$0xff] %vm373, %v531
        %545 = vst.msk [vmem:[%s537 + $0x38] sm:$0xff] %vm373, %v534
        %s546 = scalar_lea.vmem %s168, 16
        %v547 = vld [vmem:[%s546] sm:$0xf]
        %v548 = vld [vmem:[%s546 + $0x4] sm:$0xf]
        %v551 = vunpack.c.l.b16 %v547
        %v552 = vunpack.c.l.b16 %v548
        %v553 = vpack.c.b16 %v552, %v551
        %555 = vmatprep.subr.bf16.mxu0 0
        %556 = vmatpush1.bf16.msra.mxu0 0
        %557 = vmatprep.subr.bf16.mxu0 0
        %558 = vmatpush1.bf16.msra.mxu0 0
        %559 = vmatprep.subr.bf16.mxu0 0
        %560 = vmatpush1.bf16.msra.mxu0 0
        %561 = vmatprep.subr.bf16.mxu0 0
        %562 = vmatpush1.bf16.msra.mxu0 0
        %563 = vmatprep.subr.bf16.mxu0 0
        %564 = vmatpush1.bf16.msra.mxu0 0
        %565 = vmatprep.subr.bf16.mxu0 0
        %566 = vmatpush1.bf16.msra.mxu0 0
        %567 = vmatprep.subr.bf16.mxu0 0
        %568 = vmatpush1.bf16.msra.mxu0 0
        %569 = vmatprep.subr.bf16.mxu0 0
        %570 = vmatpush1.bf16.msra.mxu0 %v553
        %571 = vmatprep.subr.bf16.mxu0 0
        %572 = vmatpush2.bf16.msra.mxu0 0
        %573 = vmatprep.subr.bf16.mxu0 0
        %574 = vmatpush2.bf16.msra.mxu0 0
        %575 = vmatprep.subr.bf16.mxu0 0
        %576 = vmatpush2.bf16.msra.mxu0 0
        %577 = vmatprep.subr.bf16.mxu0 0
        %578 = vmatpush2.bf16.msra.mxu0 0
        %579 = vmatprep.subr.bf16.mxu0 0
        %580 = vmatpush2.bf16.msra.mxu0 0
        %581 = vmatprep.subr.bf16.mxu0 0
        %582 = vmatpush2.bf16.msra.mxu0 0
        %583 = vmatprep.subr.bf16.mxu0 0
        %584 = vmatpush2.bf16.msra.mxu0 0
        %585 = vmatprep.subr.bf16.mxu0 0
        %586 = vmatpush2.bf16.msra.mxu0 0
        %587 = vmatprep.mubr.bf16.mxu0 0
        %588 = vmatmul.mubr.bf16.gmra.mxu0 %v210
        %v589 = vpop.f32.mrf.mxu0
        %v590 = vadd.f32 0.0, %v589
        %v591 = vpop.f32.mrf.mxu0
        %v592 = vpop.f32.mrf.mxu0
        %v593 = vadd.f32 0.0, %v592
        %v594 = vpop.f32.mrf.mxu0
        %595 = vmatprep.mubr.bf16.mxu0 0
        %596 = vmatmul.mubr.bf16.gmra.mxu0 %v213
        %v597 = vpop.f32.mrf.mxu0
        %v598 = vadd.f32 0.0, %v597
        %v599 = vpop.f32.mrf.mxu0
        %v600 = vpop.f32.mrf.mxu0
        %v601 = vadd.f32 0.0, %v600
        %v602 = vpop.f32.mrf.mxu0
        %603 = vmatprep.mubr.bf16.mxu0 0
        %604 = vmatmul.mubr.bf16.gmra.mxu0 %v216
        %v605 = vpop.f32.mrf.mxu0
        %v606 = vadd.f32 0.0, %v605
        %v607 = vpop.f32.mrf.mxu0
        %v608 = vpop.f32.mrf.mxu0
        %v609 = vadd.f32 0.0, %v608
        %v610 = vpop.f32.mrf.mxu0
        %611 = vmatprep.mubr.bf16.mxu0 0
        %612 = vmatmul.mubr.bf16.gmra.mxu0 %v219
        %v613 = vpop.f32.mrf.mxu0
        %v614 = vadd.f32 0.0, %v613
        %v615 = vpop.f32.mrf.mxu0
        %v616 = vpop.f32.mrf.mxu0
        %v617 = vadd.f32 0.0, %v616
        %v618 = vpop.f32.mrf.mxu0
        %619 = vdwg.mxu0
        %v620 = vpack.c.bf16 %v593, %v590
        %v621 = vpack.c.bf16 %v601, %v598
        %v622 = vpack.c.bf16 %v609, %v606
        %v623 = vpack.c.bf16 %v617, %v614
        %v625 = vsel %vm208, %v620, 0
        %v628 = vsel %vm208, %v621, 0
        %v631 = vsel %vm208, %v622, 0
        %v634 = vsel %vm208, %v623, 0
        %636 = vmatprep.subr.bf16.mxu0 0
        %637 = vmatpush1.bf16.msra.mxu0 0
        %638 = vmatprep.subr.bf16.mxu0 0
        %639 = vmatpush1.bf16.msra.mxu0 0
        %640 = vmatprep.subr.bf16.mxu0 0
        %641 = vmatpush1.bf16.msra.mxu0 0
        %642 = vmatprep.subr.bf16.mxu0 0
        %643 = vmatpush1.bf16.msra.mxu0 0
        %644 = vmatprep.subr.bf16.mxu0 0
        %645 = vmatpush1.bf16.msra.mxu0 0
        %646 = vmatprep.subr.bf16.mxu0 0
        %647 = vmatpush1.bf16.msra.mxu0 0
        %648 = vmatprep.subr.bf16.mxu0 0
        %649 = vmatpush1.bf16.msra.mxu0 0
        %650 = vmatprep.subr.bf16.mxu0 0
        %651 = vmatpush1.bf16.msra.mxu0 %v294
        %652 = vmatprep.subr.bf16.mxu0 0
        %653 = vmatpush2.bf16.msra.mxu0 0
        %654 = vmatprep.subr.bf16.mxu0 0
        %655 = vmatpush2.bf16.msra.mxu0 0
        %656 = vmatprep.subr.bf16.mxu0 0
        %657 = vmatpush2.bf16.msra.mxu0 0
        %658 = vmatprep.subr.bf16.mxu0 0
        %659 = vmatpush2.bf16.msra.mxu0 0
        %660 = vmatprep.subr.bf16.mxu0 0
        %661 = vmatpush2.bf16.msra.mxu0 0
        %662 = vmatprep.subr.bf16.mxu0 0
        %663 = vmatpush2.bf16.msra.mxu0 0
        %664 = vmatprep.subr.bf16.mxu0 0
        %665 = vmatpush2.bf16.msra.mxu0 0
        %666 = vmatprep.subr.bf16.mxu0 0
        %667 = vmatpush2.bf16.msra.mxu0 0
        %668 = vmatprep.mubr.bf16.mxu0 0
        %669 = vmatmul.mubr.bf16.gmra.mxu0 %v625
        %v670 = vpop.f32.mrf.mxu0
        %v671 = vadd.f32 0.0, %v670
        %v672 = vpop.f32.mrf.mxu0
        %v673 = vpop.f32.mrf.mxu0
        %v674 = vadd.f32 0.0, %v673
        %v675 = vpop.f32.mrf.mxu0
        %676 = vmatprep.mubr.bf16.mxu0 0
        %677 = vmatmul.mubr.bf16.gmra.mxu0 %v628
        %v678 = vpop.f32.mrf.mxu0
        %v679 = vadd.f32 0.0, %v678
        %v680 = vpop.f32.mrf.mxu0
        %v681 = vpop.f32.mrf.mxu0
        %v682 = vadd.f32 0.0, %v681
        %v683 = vpop.f32.mrf.mxu0
        %684 = vmatprep.mubr.bf16.mxu0 0
        %685 = vmatmul.mubr.bf16.gmra.mxu0 %v631
        %v686 = vpop.f32.mrf.mxu0
        %v687 = vadd.f32 0.0, %v686
        %v688 = vpop.f32.mrf.mxu0
        %v689 = vpop.f32.mrf.mxu0
        %v690 = vadd.f32 0.0, %v689
        %v691 = vpop.f32.mrf.mxu0
        %692 = vmatprep.mubr.bf16.mxu0 0
        %693 = vmatmul.mubr.bf16.gmra.mxu0 %v634
        %v694 = vpop.f32.mrf.mxu0
        %v695 = vadd.f32 0.0, %v694
        %v696 = vpop.f32.mrf.mxu0
        %v697 = vpop.f32.mrf.mxu0
        %v698 = vadd.f32 0.0, %v697
        %v699 = vpop.f32.mrf.mxu0
        %700 = vdwg.mxu0
        %s701 = scalar_lea.vmem %s163, 128 [#allocation2]
        %702 = vst.msk [vmem:[%s701] sm:$0xff] %vm373, %v671
        %703 = vst.msk [vmem:[%s701 + $0x8] sm:$0xff] %vm373, %v674
        %704 = vst.msk [vmem:[%s701 + $0x10] sm:$0xff] %vm373, %v679
        %705 = vst.msk [vmem:[%s701 + $0x18] sm:$0xff] %vm373, %v682
        %706 = vst.msk [vmem:[%s701 + $0x20] sm:$0xff] %vm373, %v687
        %707 = vst.msk [vmem:[%s701 + $0x28] sm:$0xff] %vm373, %v690
        %708 = vst.msk [vmem:[%s701 + $0x30] sm:$0xff] %vm373, %v695
        %709 = vst.msk [vmem:[%s701 + $0x38] sm:$0xff] %vm373, %v698
        %s710 = scalar_lea.vmem %s168, 24
        %v711 = vld [vmem:[%s710] sm:$0xf]
        %v712 = vld [vmem:[%s710 + $0x4] sm:$0xf]
        %v715 = vunpack.c.l.b16 %v711
        %v716 = vunpack.c.l.b16 %v712
        %v717 = vpack.c.b16 %v716, %v715
        %719 = vmatprep.subr.bf16.mxu0 0
        %720 = vmatpush1.bf16.msra.mxu0 0
        %721 = vmatprep.subr.bf16.mxu0 0
        %722 = vmatpush1.bf16.msra.mxu0 0
        %723 = vmatprep.subr.bf16.mxu0 0
        %724 = vmatpush1.bf16.msra.mxu0 0
        %725 = vmatprep.subr.bf16.mxu0 0
        %726 = vmatpush1.bf16.msra.mxu0 0
        %727 = vmatprep.subr.bf16.mxu0 0
        %728 = vmatpush1.bf16.msra.mxu0 0
        %729 = vmatprep.subr.bf16.mxu0 0
        %730 = vmatpush1.bf16.msra.mxu0 0
        %731 = vmatprep.subr.bf16.mxu0 0
        %732 = vmatpush1.bf16.msra.mxu0 0
        %733 = vmatprep.subr.bf16.mxu0 0
        %734 = vmatpush1.bf16.msra.mxu0 %v717
        %735 = vmatprep.subr.bf16.mxu0 0
        %736 = vmatpush2.bf16.msra.mxu0 0
        %737 = vmatprep.subr.bf16.mxu0 0
        %738 = vmatpush2.bf16.msra.mxu0 0
        %739 = vmatprep.subr.bf16.mxu0 0
        %740 = vmatpush2.bf16.msra.mxu0 0
        %741 = vmatprep.subr.bf16.mxu0 0
        %742 = vmatpush2.bf16.msra.mxu0 0
        %743 = vmatprep.subr.bf16.mxu0 0
        %744 = vmatpush2.bf16.msra.mxu0 0
        %745 = vmatprep.subr.bf16.mxu0 0
        %746 = vmatpush2.bf16.msra.mxu0 0
        %747 = vmatprep.subr.bf16.mxu0 0
        %748 = vmatpush2.bf16.msra.mxu0 0
        %749 = vmatprep.subr.bf16.mxu0 0
        %750 = vmatpush2.bf16.msra.mxu0 0
        %751 = vmatprep.mubr.bf16.mxu0 0
        %752 = vmatmul.mubr.bf16.gmra.mxu0 %v210
        %v753 = vpop.f32.mrf.mxu0
        %v754 = vadd.f32 0.0, %v753
        %v755 = vpop.f32.mrf.mxu0
        %v756 = vpop.f32.mrf.mxu0
        %v757 = vadd.f32 0.0, %v756
        %v758 = vpop.f32.mrf.mxu0
        %759 = vmatprep.mubr.bf16.mxu0 0
        %760 = vmatmul.mubr.bf16.gmra.mxu0 %v213
        %v761 = vpop.f32.mrf.mxu0
        %v762 = vadd.f32 0.0, %v761
        %v763 = vpop.f32.mrf.mxu0
        %v764 = vpop.f32.mrf.mxu0
        %v765 = vadd.f32 0.0, %v764
        %v766 = vpop.f32.mrf.mxu0
        %767 = vmatprep.mubr.bf16.mxu0 0
        %768 = vmatmul.mubr.bf16.gmra.mxu0 %v216
        %v769 = vpop.f32.mrf.mxu0
        %v770 = vadd.f32 0.0, %v769
        %v771 = vpop.f32.mrf.mxu0
        %v772 = vpop.f32.mrf.mxu0
        %v773 = vadd.f32 0.0, %v772
        %v774 = vpop.f32.mrf.mxu0
        %775 = vmatprep.mubr.bf16.mxu0 0
        %776 = vmatmul.mubr.bf16.gmra.mxu0 %v219
        %v777 = vpop.f32.mrf.mxu0
        %v778 = vadd.f32 0.0, %v777
        %v779 = vpop.f32.mrf.mxu0
        %v780 = vpop.f32.mrf.mxu0
        %v781 = vadd.f32 0.0, %v780
        %v782 = vpop.f32.mrf.mxu0
        %783 = vdwg.mxu0
        %v784 = vpack.c.bf16 %v757, %v754
        %v785 = vpack.c.bf16 %v765, %v762
        %v786 = vpack.c.bf16 %v773, %v770
        %v787 = vpack.c.bf16 %v781, %v778
        %v789 = vsel %vm208, %v784, 0
        %v792 = vsel %vm208, %v785, 0
        %v795 = vsel %vm208, %v786, 0
        %v798 = vsel %vm208, %v787, 0
        %800 = vmatprep.subr.bf16.mxu0 0
        %801 = vmatpush1.bf16.msra.mxu0 0
        %802 = vmatprep.subr.bf16.mxu0 0
        %803 = vmatpush1.bf16.msra.mxu0 0
        %804 = vmatprep.subr.bf16.mxu0 0
        %805 = vmatpush1.bf16.msra.mxu0 0
        %806 = vmatprep.subr.bf16.mxu0 0
        %807 = vmatpush1.bf16.msra.mxu0 0
        %808 = vmatprep.subr.bf16.mxu0 0
        %809 = vmatpush1.bf16.msra.mxu0 0
        %810 = vmatprep.subr.bf16.mxu0 0
        %811 = vmatpush1.bf16.msra.mxu0 0
        %812 = vmatprep.subr.bf16.mxu0 0
        %813 = vmatpush1.bf16.msra.mxu0 0
        %814 = vmatprep.subr.bf16.mxu0 0
        %815 = vmatpush1.bf16.msra.mxu0 %v294
        %816 = vmatprep.subr.bf16.mxu0 0
        %817 = vmatpush2.bf16.msra.mxu0 0
        %818 = vmatprep.subr.bf16.mxu0 0
        %819 = vmatpush2.bf16.msra.mxu0 0
        %820 = vmatprep.subr.bf16.mxu0 0
        %821 = vmatpush2.bf16.msra.mxu0 0
        %822 = vmatprep.subr.bf16.mxu0 0
        %823 = vmatpush2.bf16.msra.mxu0 0
        %824 = vmatprep.subr.bf16.mxu0 0
        %825 = vmatpush2.bf16.msra.mxu0 0
        %826 = vmatprep.subr.bf16.mxu0 0
        %827 = vmatpush2.bf16.msra.mxu0 0
        %828 = vmatprep.subr.bf16.mxu0 0
        %829 = vmatpush2.bf16.msra.mxu0 0
        %830 = vmatprep.subr.bf16.mxu0 0
        %831 = vmatpush2.bf16.msra.mxu0 0
        %832 = vmatprep.mubr.bf16.mxu0 0
        %833 = vmatmul.mubr.bf16.gmra.mxu0 %v789
        %v834 = vpop.f32.mrf.mxu0
        %v835 = vadd.f32 0.0, %v834
        %v836 = vpop.f32.mrf.mxu0
        %v837 = vpop.f32.mrf.mxu0
        %v838 = vadd.f32 0.0, %v837
        %v839 = vpop.f32.mrf.mxu0
        %840 = vmatprep.mubr.bf16.mxu0 0
        %841 = vmatmul.mubr.bf16.gmra.mxu0 %v792
        %v842 = vpop.f32.mrf.mxu0
        %v843 = vadd.f32 0.0, %v842
        %v844 = vpop.f32.mrf.mxu0
        %v845 = vpop.f32.mrf.mxu0
        %v846 = vadd.f32 0.0, %v845
        %v847 = vpop.f32.mrf.mxu0
        %848 = vmatprep.mubr.bf16.mxu0 0
        %849 = vmatmul.mubr.bf16.gmra.mxu0 %v795
        %v850 = vpop.f32.mrf.mxu0
        %v851 = vadd.f32 0.0, %v850
        %v852 = vpop.f32.mrf.mxu0
        %v853 = vpop.f32.mrf.mxu0
        %v854 = vadd.f32 0.0, %v853
        %v855 = vpop.f32.mrf.mxu0
        %856 = vmatprep.mubr.bf16.mxu0 0
        %857 = vmatmul.mubr.bf16.gmra.mxu0 %v798
        %v858 = vpop.f32.mrf.mxu0
        %v859 = vadd.f32 0.0, %v858
        %v860 = vpop.f32.mrf.mxu0
        %v861 = vpop.f32.mrf.mxu0
        %v862 = vadd.f32 0.0, %v861
        %v863 = vpop.f32.mrf.mxu0
        %864 = vdwg.mxu0
        %s865 = scalar_lea.vmem %s163, 192 [#allocation2]
        %866 = vst.msk [vmem:[%s865] sm:$0xff] %vm373, %v835
        %867 = vst.msk [vmem:[%s865 + $0x8] sm:$0xff] %vm373, %v838
        %868 = vst.msk [vmem:[%s865 + $0x10] sm:$0xff] %vm373, %v843
        %869 = vst.msk [vmem:[%s865 + $0x18] sm:$0xff] %vm373, %v846
        %870 = vst.msk [vmem:[%s865 + $0x20] sm:$0xff] %vm373, %v851
        %871 = vst.msk [vmem:[%s865 + $0x28] sm:$0xff] %vm373, %v854
        %872 = vst.msk [vmem:[%s865 + $0x30] sm:$0xff] %vm373, %v859
        %873 = vst.msk [vmem:[%s865 + $0x38] sm:$0xff] %vm373, %v862
        %s874 = sand.u32 %s93, 1
        %s875 = scalar_lea.sflag [#allocation3], %s874
        %s876 = sand.u32 %s93, 1
        %s877 = smul.addr %s876, 256
        %s878 = scalar_lea.vmem [#allocation2], %s877
        // Predicated region
        $region33: #{snn_head_forward.3} parent=31 // pred_check
          %p879 = pneg %p103
        $region34: #{snn_head_forward.3} parent=31 // pred_check_branch
          %881 = sbr.rel (%p879) target = $region36
        $region35: #{snn_head_forward.3} parent=31 // pred_region
          %s883 = ssub.s32 4096, 4096
          %884 = vsyncadd %s875, %s883
          %s885 = smul.addr %s17, 32
          %s886 = smul.addr %s885, 128
          %s887 = scalar_lea.hbm %s3, %s886
          %s888 = sshll.u32 %s878, 4
          %s889 = int_to_ptr.vmem [resolvable:$true] %s888
          %894 = dma.vmem_to_hbm [thread:$0]  %s889, 4096, %s887, %s875, 128, 128, 8
        $region36: #{snn_head_forward.3} parent=31 // pred_fallthru
          _
      $region32: #{snn_head_forward.3} parent=5 // pred_fallthru
        _
      %p895 = scmp.le.s32.totalorder 2, %s12
      // Predicated region
      $region37: #{snn_head_forward.3} parent=5 // pred_check
        %p896 = pneg %p895
      $region38: #{snn_head_forward.3} parent=5 // pred_check_branch
        %898 = sbr.rel (%p896) target = $region40
      $region39: #{snn_head_forward.3} parent=5 // pred_region
        %s899 = ssub.s32 %s12, 2
        // Predicated region
        $region41: #{snn_head_forward.3} parent=39 // pred_check
          %p900 = pneg %p109
        $region42: #{snn_head_forward.3} parent=39 // pred_check_branch
          %902 = sbr.rel (%p900) target = $region44
        $region43: #{snn_head_forward.3} parent=39 // pred_region
          %s903 = sand.u32 %s94, 1
          %s904 = scalar_lea.sflag [#allocation3], %s903
          %s905 = sand.u32 %s94, 1
          %s906 = smul.addr %s905, 256
          %s907 = scalar_lea.vmem [#allocation2], %s906
          %908 = dma.done %s904, 4096
        $region44: #{snn_head_forward.3} parent=39 // pred_fallthru
          _
      $region40: #{snn_head_forward.3} parent=5 // pred_fallthru
        _
    $region6: #{snn_head_forward.3} parent=1 // loop_footer
      %s16 = sadd.s32 1, %s12
    $region7: #{snn_head_forward.3} parent=1 // loop_footer_branch
      %11 = sbr.rel target = $region3
    $region8: #{snn_head_forward.3} parent=1 // loop_exit
      _
    %909 = vsyncpa [#allocation3], 1
    %s910 = scalar_lea.sflag [#allocation3], 1
    %911 = vsyncpa %s910, 1

</llo_original>
